<compile_context>
chip_gen: v7x
topology: tpu7x:2x2x1
jax: 0.10.0
libtpu: 0.0.40
codegen_flags: <defaults>
</compile_context>

<pallas_src>
import functools

import jax
import jax.numpy as jnp
from jax import lax
from jax.experimental import pallas as pl
from jax.experimental.pallas import tpu as pltpu


def gru_model_kernel(x2_ref,    # (T*Bp, 2I) rows [t*Bp, t*Bp+B) = [x[t,b] | x[T-1-t,b]], rest zero
                     wx_ref,    # (2I, 6H)   fused input weight, cols [r_f r_b z_f z_b n_f n_b]  (f32)
                     bx_ref,    # (1, 6H)    b_ih (+ b_hh for the r/z gates) pre-summed           (f32)
                     wh_ref,    # (2H, 6H)   fused direction-block-diagonal hidden weight         (bf16)
                     bhn_ref,   # (1, 2H)    b_hh of the n gate, [fwd | bwd]                      (f32)
                     wl_ref,    # (2H, O)    linear head weight (pre-transposed)                  (f32)
                     bl_ref,    # (1, O)                                                          (f32)
                     out_ref,   # (Bp, O)
                     *, seq_len, batch_pad, hidden_size):
    T, Bp, H = seq_len, batch_pad, hidden_size

    # ---- Hoisted input projection: one f32 matmul for all T steps and both
    # directions; biases folded in. No per-step input matmul remains.
    gx = (jnp.dot(x2_ref[...], wx_ref[...], preferred_element_type=jnp.float32)
          + bx_ref[...])                                     # (T*Bp, 6H)

    wh = wh_ref[...]                                         # bf16, loaded once (loop-invariant)
    bhn = jnp.broadcast_to(bhn_ref[...], (Bp, 2 * H))        # hoisted broadcast (once)

    h = jnp.zeros((Bp, 2 * H), dtype=jnp.float32)            # [h_f | h_b], f32 carry

    # ---- Fully-unrolled serial recurrence: one fused bf16 MXU op per step covers
    # both directions and all three gates; f32 accumulation.
    for t in range(T):
        gx_t = gx[t * Bp:(t + 1) * Bp, :]                    # 8-sublane-aligned static slice
        gh = jnp.dot(h.astype(jnp.bfloat16), wh,
                     preferred_element_type=jnp.float32)     # (Bp, 6H)
        # r/z gates: lanes [0, 4H).  Explicit logistic (exp lowers to EUP).
        pre_rz = gx_t[:, :4 * H] + gh[:, :4 * H]
        rz = 1.0 / (1.0 + jnp.exp(-pre_rz))
        r = rz[:, :2 * H]
        z = rz[:, 2 * H:]
        # n gate: lanes [4H, 6H).  b_hh_n must be added before the multiply by r
        # (PyTorch formulation), so it stays in-loop (pre-broadcast constant).
        n = jnp.tanh(gx_t[:, 4 * H:] + r * (gh[:, 4 * H:] + bhn))
        h = (1.0 - z) * n + z * h

    # h == [h_fwd_final | h_bwd_final] == h_n.permute(1,0,2).flatten(1): no concat needed.
    out_ref[...] = (jnp.dot(h, wl_ref[...], preferred_element_type=jnp.float32)
                    + bl_ref[...])


def gru_model_forward(x, kparams, hidden_size, output_size):
    """x: (B, T, I) float32, batch_first (PyTorch convention)."""
    B, T, I = x.shape
    Bp = max(8, ((B + 7) // 8) * 8)   # pad batch to a sublane tile

    # Layout plumbing only (no compute): time-major, pack [x[t] | x[T-1-t]] along
    # lanes so one in-kernel matmul produces both directions' gates, and pad each
    # timestep's rows to an 8-sublane block so in-loop slices are tile-aligned.
    x_tbi = jnp.transpose(x, (1, 0, 2))                          # (T, B, I)
    x2 = jnp.concatenate([x_tbi, x_tbi[::-1]], axis=-1)          # (T, B, 2I)
    x2 = jnp.pad(x2, ((0, 0), (0, Bp - B), (0, 0)))              # (T, Bp, 2I)
    x2 = x2.reshape(T * Bp, 2 * I)                               # (T*Bp, 2I)

    kernel = functools.partial(gru_model_kernel, seq_len=T, batch_pad=Bp,
                               hidden_size=hidden_size)
    vmem = pl.BlockSpec(memory_space=pltpu.MemorySpace.VMEM)

    out = pl.pallas_call(
        kernel,
        out_shape=jax.ShapeDtypeStruct((Bp, output_size), jnp.float32),
        in_specs=[vmem] * 7,
        out_specs=vmem,
    )(x2, kparams["wx"], kparams["bx"], kparams["wh"], kparams["bhn"],
      kparams["wl_t"], kparams["bl"])
    return out[:B]


def init_raw_params(key, input_size, hidden_size, output_size):
    """PyTorch-layout params: weight_ih (3H, I), weight_hh (3H, H), gates [r, z, n]."""
    H, I, O = hidden_size, input_size, output_size
    k_gru = 1.0 / jnp.sqrt(jnp.float32(H))
    k_lin = 1.0 / jnp.sqrt(jnp.float32(2 * H))
    keys = jax.random.split(key, 10)

    def u(k, shape, scale):
        return jax.random.uniform(k, shape, jnp.float32, -scale, scale)

    return dict(
        w_ih_f=u(keys[0], (3 * H, I), k_gru), w_hh_f=u(keys[1], (3 * H, H), k_gru),
        b_ih_f=u(keys[2], (3 * H,), k_gru),   b_hh_f=u(keys[3], (3 * H,), k_gru),
        w_ih_b=u(keys[4], (3 * H, I), k_gru), w_hh_b=u(keys[5], (3 * H, H), k_gru),
        b_ih_b=u(keys[6], (3 * H,), k_gru),   b_hh_b=u(keys[7], (3 * H,), k_gru),
        w_lin=u(keys[8], (O, 2 * H), k_lin),  b_lin=u(keys[9], (O,), k_lin),
    )


def pack_params(raw, input_size, hidden_size):
    """Build the fused / pre-transposed weights the kernel expects."""
    H, I = hidden_size, input_size

    def gate_blocks(w):   # (3H, K) -> transposed (K, H) blocks r, z, n
        return w[:H].T, w[H:2 * H].T, w[2 * H:].T

    wir_f, wiz_f, win_f = gate_blocks(raw["w_ih_f"])
    wir_b, wiz_b, win_b = gate_blocks(raw["w_ih_b"])
    whr_f, whz_f, whn_f = gate_blocks(raw["w_hh_f"])
    whr_b, whz_b, whn_b = gate_blocks(raw["w_hh_b"])

    zI = jnp.zeros((I, H), jnp.float32)
    zH = jnp.zeros((H, H), jnp.float32)

    # Fused input weight (2I, 6H): top I rows map x[t] (forward gates), bottom I rows
    # map x[T-1-t] (backward gates). Columns grouped [r_f r_b z_f z_b n_f n_b].
    wx = jnp.concatenate([
        jnp.concatenate([wir_f, zI, wiz_f, zI, win_f, zI], axis=1),
        jnp.concatenate([zI, wir_b, zI, wiz_b, zI, win_b], axis=1),
    ], axis=0)

    bif, bhf = raw["b_ih_f"], raw["b_hh_f"]
    bib, bhb = raw["b_ih_b"], raw["b_hh_b"]
    # b_ih for all gates; b_hh folded in for r/z (they just sum); n keeps only b_ih.
    bx = jnp.concatenate([
        bif[:H] + bhf[:H],               bib[:H] + bhb[:H],
        bif[H:2 * H] + bhf[H:2 * H],     bib[H:2 * H] + bhb[H:2 * H],
        bif[2 * H:],                     bib[2 * H:],
    ]).reshape(1, 6 * H)

    # Fused direction-block-diagonal hidden weight (2H, 6H): rows [0,H) act on h_f,
    # rows [H,2H) act on h_b.  Stored bf16 (recurrent-matmul operand).
    wh = jnp.concatenate([
        jnp.concatenate([whr_f, zH, whz_f, zH, whn_f, zH], axis=1),
        jnp.concatenate([zH, whr_b, zH, whz_b, zH, whn_b], axis=1),
    ], axis=0).astype(jnp.bfloat16)

    bhn = jnp.concatenate([bhf[2 * H:], bhb[2 * H:]]).reshape(1, 2 * H)

    return dict(wx=wx, bx=bx, wh=wh, bhn=bhn,
                wl_t=raw["w_lin"].T, bl=raw["b_lin"].reshape(1, -1))


def reference_forward(x, raw, hidden_size):
    """Pure-JAX f32 reference using the raw PyTorch-layout parameters."""
    B, T, I = x.shape
    H = hidden_size

    def cell(x_t, h, w_ih, w_hh, b_ih, b_hh):
        gx = x_t @ w_ih.T + b_ih
        gh = h @ w_hh.T + b_hh
        r = jax.nn.sigmoid(gx[:, :H] + gh[:, :H])
        z = jax.nn.sigmoid(gx[:, H:2 * H] + gh[:, H:2 * H])
        n = jnp.tanh(gx[:, 2 * H:] + r * gh[:, 2 * H:])
        return (1.0 - z) * n + z * h

    def run(xs, w_ih, w_hh, b_ih, b_hh):
        def step(h, x_t):
            return cell(x_t, h, w_ih, w_hh, b_ih, b_hh), None
        h_final, _ = lax.scan(step, jnp.zeros((B, H), jnp.float32), xs)
        return h_final

    x_tbi = jnp.transpose(x, (1, 0, 2))
    h_f = run(x_tbi, raw["w_ih_f"], raw["w_hh_f"], raw["b_ih_f"], raw["b_hh_f"])
    h_b = run(x_tbi[::-1], raw["w_ih_b"], raw["w_hh_b"], raw["b_ih_b"], raw["b_hh_b"])
    h_cat = jnp.concatenate([h_f, h_b], axis=-1)
    return h_cat @ raw["w_lin"].T + raw["b_lin"]


if __name__ == "__main__":
    B, T, I, H, O = 2, 8, 4, 32, 16

    key = jax.random.PRNGKey(0)
    k_x, k_p = jax.random.split(key)
    x = jax.random.normal(k_x, (B, T, I), dtype=jnp.float32)

    raw = init_raw_params(k_p, I, H, O)
    kparams = pack_params(raw, I, H)

    out = gru_model_forward(x, kparams, hidden_size=H, output_size=O)
    out = jax.block_until_ready(out)

    ref = jax.block_until_ready(reference_forward(x, raw, hidden_size=H))
    assert out.shape == (B, O)
    # Tolerance relaxed vs the all-f32 variant: the recurrent matmul uses bf16
    # operands (f32 accumulation), per the perf review.
    assert jnp.allclose(out, ref, atol=3e-2, rtol=3e-2), "mismatch vs JAX reference"

    print("KERNEL_OK")
</pallas_src>

<mosaic_0001>
module attributes {stable_mosaic.version = 11 : i64} {
  func.func @gru_model_kernel(%arg0: memref<64x8xf32, #tpu.memory_space<vmem>>, %arg1: memref<8x192xf32, #tpu.memory_space<vmem>>, %arg2: memref<1x192xf32, #tpu.memory_space<vmem>>, %arg3: memref<64x192xbf16, #tpu.memory_space<vmem>>, %arg4: memref<1x64xf32, #tpu.memory_space<vmem>>, %arg5: memref<64x16xf32, #tpu.memory_space<vmem>>, %arg6: memref<1x16xf32, #tpu.memory_space<vmem>>, %arg7: memref<8x16xf32, #tpu.memory_space<vmem>>) attributes {dimension_semantics = [], scalar_prefetch = 0 : i64, scratch_operands = 0 : i64, tpu.core_type = #tpu.core_type<tc>} {
    %c0 = arith.constant 0 : index
    %c0_0 = arith.constant 0 : index
    %0 = vector.load %arg0[%c0, %c0_0] : memref<64x8xf32, #tpu.memory_space<vmem>>, vector<64x8xf32>
    %c0_1 = arith.constant 0 : index
    %c0_2 = arith.constant 0 : index
    %1 = vector.load %arg1[%c0_1, %c0_2] : memref<8x192xf32, #tpu.memory_space<vmem>>, vector<8x192xf32>
    %cst = arith.constant dense<0.000000e+00> : vector<64x192xf32>
    %2 = tpu.matmul %0, %1, %cst {dimension_numbers = #tpu.dot_dimension_numbers<[1], [0], [0], [1], [0, 0, 1, 1], [], []>} : vector<64x8xf32>, vector<8x192xf32>, vector<64x192xf32> -> vector<64x192xf32>
    %c0_3 = arith.constant 0 : index
    %c0_4 = arith.constant 0 : index
    %3 = vector.load %arg2[%c0_3, %c0_4] : memref<1x192xf32, #tpu.memory_space<vmem>>, vector<1x192xf32>
    %4 = vector.broadcast %3 : vector<1x192xf32> to vector<64x192xf32>
    %5 = arith.addf %2, %4 : vector<64x192xf32>
    %c0_5 = arith.constant 0 : index
    %c0_6 = arith.constant 0 : index
    %6 = vector.load %arg3[%c0_5, %c0_6] : memref<64x192xbf16, #tpu.memory_space<vmem>>, vector<64x192xbf16>
    %c0_7 = arith.constant 0 : index
    %c0_8 = arith.constant 0 : index
    %7 = vector.load %arg4[%c0_7, %c0_8] : memref<1x64xf32, #tpu.memory_space<vmem>>, vector<1x64xf32>
    %8 = vector.shape_cast %7 : vector<1x64xf32> to vector<1x64xf32>
    %9 = vector.broadcast %8 : vector<1x64xf32> to vector<8x64xf32>
    %cst_9 = arith.constant 0.000000e+00 : f32
    %10 = vector.broadcast %cst_9 : f32 to vector<8x64xf32>
    %11 = vector.extract_strided_slice %5 {offsets = [0, 0], sizes = [8, 192], strides = [1, 1]} : vector<64x192xf32> to vector<8x192xf32>
    %12 = arith.truncf %10 : vector<8x64xf32> to vector<8x64xbf16>
    %cst_10 = arith.constant dense<0.000000e+00> : vector<8x192xf32>
    %13 = tpu.matmul %12, %6, %cst_10 {dimension_numbers = #tpu.dot_dimension_numbers<[1], [0], [0], [1], [0, 0, 1, 1], [], []>} : vector<8x64xbf16>, vector<64x192xbf16>, vector<8x192xf32> -> vector<8x192xf32>
    %14 = vector.extract_strided_slice %11 {offsets = [0, 0], sizes = [8, 128], strides = [1, 1]} : vector<8x192xf32> to vector<8x128xf32>
    %15 = vector.extract_strided_slice %13 {offsets = [0, 0], sizes = [8, 128], strides = [1, 1]} : vector<8x192xf32> to vector<8x128xf32>
    %16 = arith.addf %14, %15 : vector<8x128xf32>
    %cst_11 = arith.constant 0.000000e+00 : f32
    %17 = vector.broadcast %cst_11 : f32 to vector<8x128xf32>
    %18 = arith.subf %17, %16 : vector<8x128xf32>
    %19 = math.exp %18 : vector<8x128xf32>
    %cst_12 = arith.constant 1.000000e+00 : f32
    %20 = vector.broadcast %cst_12 : f32 to vector<8x128xf32>
    %21 = arith.addf %20, %19 : vector<8x128xf32>
    %cst_13 = arith.constant 1.000000e+00 : f32
    %22 = vector.broadcast %cst_13 : f32 to vector<8x128xf32>
    %23 = arith.divf %22, %21 : vector<8x128xf32>
    %24 = vector.extract_strided_slice %23 {offsets = [0, 0], sizes = [8, 64], strides = [1, 1]} : vector<8x128xf32> to vector<8x64xf32>
    %25 = vector.extract_strided_slice %23 {offsets = [0, 64], sizes = [8, 64], strides = [1, 1]} : vector<8x128xf32> to vector<8x64xf32>
    %26 = vector.extract_strided_slice %11 {offsets = [0, 128], sizes = [8, 64], strides = [1, 1]} : vector<8x192xf32> to vector<8x64xf32>
    %27 = vector.extract_strided_slice %13 {offsets = [0, 128], sizes = [8, 64], strides = [1, 1]} : vector<8x192xf32> to vector<8x64xf32>
    %28 = arith.addf %27, %9 : vector<8x64xf32>
    %29 = arith.mulf %24, %28 : vector<8x64xf32>
    %30 = arith.addf %26, %29 : vector<8x64xf32>
    %31 = math.tanh %30 : vector<8x64xf32>
    %cst_14 = arith.constant 1.000000e+00 : f32
    %32 = vector.broadcast %cst_14 : f32 to vector<8x64xf32>
    %33 = arith.subf %32, %25 : vector<8x64xf32>
    %34 = arith.mulf %33, %31 : vector<8x64xf32>
    %35 = arith.mulf %25, %10 : vector<8x64xf32>
    %36 = arith.addf %34, %35 : vector<8x64xf32>
    %37 = vector.extract_strided_slice %5 {offsets = [8, 0], sizes = [8, 192], strides = [1, 1]} : vector<64x192xf32> to vector<8x192xf32>
    %38 = arith.truncf %36 : vector<8x64xf32> to vector<8x64xbf16>
    %cst_15 = arith.constant dense<0.000000e+00> : vector<8x192xf32>
    %39 = tpu.matmul %38, %6, %cst_15 {dimension_numbers = #tpu.dot_dimension_numbers<[1], [0], [0], [1], [0, 0, 1, 1], [], []>} : vector<8x64xbf16>, vector<64x192xbf16>, vector<8x192xf32> -> vector<8x192xf32>
    %40 = vector.extract_strided_slice %37 {offsets = [0, 0], sizes = [8, 128], strides = [1, 1]} : vector<8x192xf32> to vector<8x128xf32>
    %41 = vector.extract_strided_slice %39 {offsets = [0, 0], sizes = [8, 128], strides = [1, 1]} : vector<8x192xf32> to vector<8x128xf32>
    %42 = arith.addf %40, %41 : vector<8x128xf32>
    %cst_16 = arith.constant 0.000000e+00 : f32
    %43 = vector.broadcast %cst_16 : f32 to vector<8x128xf32>
    %44 = arith.subf %43, %42 : vector<8x128xf32>
    %45 = math.exp %44 : vector<8x128xf32>
    %cst_17 = arith.constant 1.000000e+00 : f32
    %46 = vector.broadcast %cst_17 : f32 to vector<8x128xf32>
    %47 = arith.addf %46, %45 : vector<8x128xf32>
    %cst_18 = arith.constant 1.000000e+00 : f32
    %48 = vector.broadcast %cst_18 : f32 to vector<8x128xf32>
    %49 = arith.divf %48, %47 : vector<8x128xf32>
    %50 = vector.extract_strided_slice %49 {offsets = [0, 0], sizes = [8, 64], strides = [1, 1]} : vector<8x128xf32> to vector<8x64xf32>
    %51 = vector.extract_strided_slice %49 {offsets = [0, 64], sizes = [8, 64], strides = [1, 1]} : vector<8x128xf32> to vector<8x64xf32>
    %52 = vector.extract_strided_slice %37 {offsets = [0, 128], sizes = [8, 64], strides = [1, 1]} : vector<8x192xf32> to vector<8x64xf32>
    %53 = vector.extract_strided_slice %39 {offsets = [0, 128], sizes = [8, 64], strides = [1, 1]} : vector<8x192xf32> to vector<8x64xf32>
    %54 = arith.addf %53, %9 : vector<8x64xf32>
    %55 = arith.mulf %50, %54 : vector<8x64xf32>
    %56 = arith.addf %52, %55 : vector<8x64xf32>
    %57 = math.tanh %56 : vector<8x64xf32>
    %cst_19 = arith.constant 1.000000e+00 : f32
    %58 = vector.broadcast %cst_19 : f32 to vector<8x64xf32>
    %59 = arith.subf %58, %51 : vector<8x64xf32>
    %60 = arith.mulf %59, %57 : vector<8x64xf32>
    %61 = arith.mulf %51, %36 : vector<8x64xf32>
    %62 = arith.addf %60, %61 : vector<8x64xf32>
    %63 = vector.extract_strided_slice %5 {offsets = [16, 0], sizes = [8, 192], strides = [1, 1]} : vector<64x192xf32> to vector<8x192xf32>
    %64 = arith.truncf %62 : vector<8x64xf32> to vector<8x64xbf16>
    %cst_20 = arith.constant dense<0.000000e+00> : vector<8x192xf32>
    %65 = tpu.matmul %64, %6, %cst_20 {dimension_numbers = #tpu.dot_dimension_numbers<[1], [0], [0], [1], [0, 0, 1, 1], [], []>} : vector<8x64xbf16>, vector<64x192xbf16>, vector<8x192xf32> -> vector<8x192xf32>
    %66 = vector.extract_strided_slice %63 {offsets = [0, 0], sizes = [8, 128], strides = [1, 1]} : vector<8x192xf32> to vector<8x128xf32>
    %67 = vector.extract_strided_slice %65 {offsets = [0, 0], sizes = [8, 128], strides = [1, 1]} : vector<8x192xf32> to vector<8x128xf32>
    %68 = arith.addf %66, %67 : vector<8x128xf32>
    %cst_21 = arith.constant 0.000000e+00 : f32
    %69 = vector.broadcast %cst_21 : f32 to vector<8x128xf32>
    %70 = arith.subf %69, %68 : vector<8x128xf32>
    %71 = math.exp %70 : vector<8x128xf32>
    %cst_22 = arith.constant 1.000000e+00 : f32
    %72 = vector.broadcast %cst_22 : f32 to vector<8x128xf32>
    %73 = arith.addf %72, %71 : vector<8x128xf32>
    %cst_23 = arith.constant 1.000000e+00 : f32
    %74 = vector.broadcast %cst_23 : f32 to vector<8x128xf32>
    %75 = arith.divf %74, %73 : vector<8x128xf32>
    %76 = vector.extract_strided_slice %75 {offsets = [0, 0], sizes = [8, 64], strides = [1, 1]} : vector<8x128xf32> to vector<8x64xf32>
    %77 = vector.extract_strided_slice %75 {offsets = [0, 64], sizes = [8, 64], strides = [1, 1]} : vector<8x128xf32> to vector<8x64xf32>
    %78 = vector.extract_strided_slice %63 {offsets = [0, 128], sizes = [8, 64], strides = [1, 1]} : vector<8x192xf32> to vector<8x64xf32>
    %79 = vector.extract_strided_slice %65 {offsets = [0, 128], sizes = [8, 64], strides = [1, 1]} : vector<8x192xf32> to vector<8x64xf32>
    %80 = arith.addf %79, %9 : vector<8x64xf32>
    %81 = arith.mulf %76, %80 : vector<8x64xf32>
    %82 = arith.addf %78, %81 : vector<8x64xf32>
    %83 = math.tanh %82 : vector<8x64xf32>
    %cst_24 = arith.constant 1.000000e+00 : f32
    %84 = vector.broadcast %cst_24 : f32 to vector<8x64xf32>
    %85 = arith.subf %84, %77 : vector<8x64xf32>
    %86 = arith.mulf %85, %83 : vector<8x64xf32>
    %87 = arith.mulf %77, %62 : vector<8x64xf32>
    %88 = arith.addf %86, %87 : vector<8x64xf32>
    %89 = vector.extract_strided_slice %5 {offsets = [24, 0], sizes = [8, 192], strides = [1, 1]} : vector<64x192xf32> to vector<8x192xf32>
    %90 = arith.truncf %88 : vector<8x64xf32> to vector<8x64xbf16>
    %cst_25 = arith.constant dense<0.000000e+00> : vector<8x192xf32>
    %91 = tpu.matmul %90, %6, %cst_25 {dimension_numbers = #tpu.dot_dimension_numbers<[1], [0], [0], [1], [0, 0, 1, 1], [], []>} : vector<8x64xbf16>, vector<64x192xbf16>, vector<8x192xf32> -> vector<8x192xf32>
    %92 = vector.extract_strided_slice %89 {offsets = [0, 0], sizes = [8, 128], strides = [1, 1]} : vector<8x192xf32> to vector<8x128xf32>
    %93 = vector.extract_strided_slice %91 {offsets = [0, 0], sizes = [8, 128], strides = [1, 1]} : vector<8x192xf32> to vector<8x128xf32>
    %94 = arith.addf %92, %93 : vector<8x128xf32>
    %cst_26 = arith.constant 0.000000e+00 : f32
    %95 = vector.broadcast %cst_26 : f32 to vector<8x128xf32>
    %96 = arith.subf %95, %94 : vector<8x128xf32>
    %97 = math.exp %96 : vector<8x128xf32>
    %cst_27 = arith.constant 1.000000e+00 : f32
    %98 = vector.broadcast %cst_27 : f32 to vector<8x128xf32>
    %99 = arith.addf %98, %97 : vector<8x128xf32>
    %cst_28 = arith.constant 1.000000e+00 : f32
    %100 = vector.broadcast %cst_28 : f32 to vector<8x128xf32>
    %101 = arith.divf %100, %99 : vector<8x128xf32>
    %102 = vector.extract_strided_slice %101 {offsets = [0, 0], sizes = [8, 64], strides = [1, 1]} : vector<8x128xf32> to vector<8x64xf32>
    %103 = vector.extract_strided_slice %101 {offsets = [0, 64], sizes = [8, 64], strides = [1, 1]} : vector<8x128xf32> to vector<8x64xf32>
    %104 = vector.extract_strided_slice %89 {offsets = [0, 128], sizes = [8, 64], strides = [1, 1]} : vector<8x192xf32> to vector<8x64xf32>
    %105 = vector.extract_strided_slice %91 {offsets = [0, 128], sizes = [8, 64], strides = [1, 1]} : vector<8x192xf32> to vector<8x64xf32>
    %106 = arith.addf %105, %9 : vector<8x64xf32>
    %107 = arith.mulf %102, %106 : vector<8x64xf32>
    %108 = arith.addf %104, %107 : vector<8x64xf32>
    %109 = math.tanh %108 : vector<8x64xf32>
    %cst_29 = arith.constant 1.000000e+00 : f32
    %110 = vector.broadcast %cst_29 : f32 to vector<8x64xf32>
    %111 = arith.subf %110, %103 : vector<8x64xf32>
    %112 = arith.mulf %111, %109 : vector<8x64xf32>
    %113 = arith.mulf %103, %88 : vector<8x64xf32>
    %114 = arith.addf %112, %113 : vector<8x64xf32>
    %115 = vector.extract_strided_slice %5 {offsets = [32, 0], sizes = [8, 192], strides = [1, 1]} : vector<64x192xf32> to vector<8x192xf32>
    %116 = arith.truncf %114 : vector<8x64xf32> to vector<8x64xbf16>
    %cst_30 = arith.constant dense<0.000000e+00> : vector<8x192xf32>
    %117 = tpu.matmul %116, %6, %cst_30 {dimension_numbers = #tpu.dot_dimension_numbers<[1], [0], [0], [1], [0, 0, 1, 1], [], []>} : vector<8x64xbf16>, vector<64x192xbf16>, vector<8x192xf32> -> vector<8x192xf32>
    %118 = vector.extract_strided_slice %115 {offsets = [0, 0], sizes = [8, 128], strides = [1, 1]} : vector<8x192xf32> to vector<8x128xf32>
    %119 = vector.extract_strided_slice %117 {offsets = [0, 0], sizes = [8, 128], strides = [1, 1]} : vector<8x192xf32> to vector<8x128xf32>
    %120 = arith.addf %118, %119 : vector<8x128xf32>
    %cst_31 = arith.constant 0.000000e+00 : f32
    %121 = vector.broadcast %cst_31 : f32 to vector<8x128xf32>
    %122 = arith.subf %121, %120 : vector<8x128xf32>
    %123 = math.exp %122 : vector<8x128xf32>
    %cst_32 = arith.constant 1.000000e+00 : f32
    %124 = vector.broadcast %cst_32 : f32 to vector<8x128xf32>
    %125 = arith.addf %124, %123 : vector<8x128xf32>
    %cst_33 = arith.constant 1.000000e+00 : f32
    %126 = vector.broadcast %cst_33 : f32 to vector<8x128xf32>
    %127 = arith.divf %126, %125 : vector<8x128xf32>
    %128 = vector.extract_strided_slice %127 {offsets = [0, 0], sizes = [8, 64], strides = [1, 1]} : vector<8x128xf32> to vector<8x64xf32>
    %129 = vector.extract_strided_slice %127 {offsets = [0, 64], sizes = [8, 64], strides = [1, 1]} : vector<8x128xf32> to vector<8x64xf32>
    %130 = vector.extract_strided_slice %115 {offsets = [0, 128], sizes = [8, 64], strides = [1, 1]} : vector<8x192xf32> to vector<8x64xf32>
    %131 = vector.extract_strided_slice %117 {offsets = [0, 128], sizes = [8, 64], strides = [1, 1]} : vector<8x192xf32> to vector<8x64xf32>
    %132 = arith.addf %131, %9 : vector<8x64xf32>
    %133 = arith.mulf %128, %132 : vector<8x64xf32>
    %134 = arith.addf %130, %133 : vector<8x64xf32>
    %135 = math.tanh %134 : vector<8x64xf32>
    %cst_34 = arith.constant 1.000000e+00 : f32
    %136 = vector.broadcast %cst_34 : f32 to vector<8x64xf32>
    %137 = arith.subf %136, %129 : vector<8x64xf32>
    %138 = arith.mulf %137, %135 : vector<8x64xf32>
    %139 = arith.mulf %129, %114 : vector<8x64xf32>
    %140 = arith.addf %138, %139 : vector<8x64xf32>
    %141 = vector.extract_strided_slice %5 {offsets = [40, 0], sizes = [8, 192], strides = [1, 1]} : vector<64x192xf32> to vector<8x192xf32>
    %142 = arith.truncf %140 : vector<8x64xf32> to vector<8x64xbf16>
    %cst_35 = arith.constant dense<0.000000e+00> : vector<8x192xf32>
    %143 = tpu.matmul %142, %6, %cst_35 {dimension_numbers = #tpu.dot_dimension_numbers<[1], [0], [0], [1], [0, 0, 1, 1], [], []>} : vector<8x64xbf16>, vector<64x192xbf16>, vector<8x192xf32> -> vector<8x192xf32>
    %144 = vector.extract_strided_slice %141 {offsets = [0, 0], sizes = [8, 128], strides = [1, 1]} : vector<8x192xf32> to vector<8x128xf32>
    %145 = vector.extract_strided_slice %143 {offsets = [0, 0], sizes = [8, 128], strides = [1, 1]} : vector<8x192xf32> to vector<8x128xf32>
    %146 = arith.addf %144, %145 : vector<8x128xf32>
    %cst_36 = arith.constant 0.000000e+00 : f32
    %147 = vector.broadcast %cst_36 : f32 to vector<8x128xf32>
    %148 = arith.subf %147, %146 : vector<8x128xf32>
    %149 = math.exp %148 : vector<8x128xf32>
    %cst_37 = arith.constant 1.000000e+00 : f32
    %150 = vector.broadcast %cst_37 : f32 to vector<8x128xf32>
    %151 = arith.addf %150, %149 : vector<8x128xf32>
    %cst_38 = arith.constant 1.000000e+00 : f32
    %152 = vector.broadcast %cst_38 : f32 to vector<8x128xf32>
    %153 = arith.divf %152, %151 : vector<8x128xf32>
    %154 = vector.extract_strided_slice %153 {offsets = [0, 0], sizes = [8, 64], strides = [1, 1]} : vector<8x128xf32> to vector<8x64xf32>
    %155 = vector.extract_strided_slice %153 {offsets = [0, 64], sizes = [8, 64], strides = [1, 1]} : vector<8x128xf32> to vector<8x64xf32>
    %156 = vector.extract_strided_slice %141 {offsets = [0, 128], sizes = [8, 64], strides = [1, 1]} : vector<8x192xf32> to vector<8x64xf32>
    %157 = vector.extract_strided_slice %143 {offsets = [0, 128], sizes = [8, 64], strides = [1, 1]} : vector<8x192xf32> to vector<8x64xf32>
    %158 = arith.addf %157, %9 : vector<8x64xf32>
    %159 = arith.mulf %154, %158 : vector<8x64xf32>
    %160 = arith.addf %156, %159 : vector<8x64xf32>
    %161 = math.tanh %160 : vector<8x64xf32>
    %cst_39 = arith.constant 1.000000e+00 : f32
    %162 = vector.broadcast %cst_39 : f32 to vector<8x64xf32>
    %163 = arith.subf %162, %155 : vector<8x64xf32>
    %164 = arith.mulf %163, %161 : vector<8x64xf32>
    %165 = arith.mulf %155, %140 : vector<8x64xf32>
    %166 = arith.addf %164, %165 : vector<8x64xf32>
    %167 = vector.extract_strided_slice %5 {offsets = [48, 0], sizes = [8, 192], strides = [1, 1]} : vector<64x192xf32> to vector<8x192xf32>
    %168 = arith.truncf %166 : vector<8x64xf32> to vector<8x64xbf16>
    %cst_40 = arith.constant dense<0.000000e+00> : vector<8x192xf32>
    %169 = tpu.matmul %168, %6, %cst_40 {dimension_numbers = #tpu.dot_dimension_numbers<[1], [0], [0], [1], [0, 0, 1, 1], [], []>} : vector<8x64xbf16>, vector<64x192xbf16>, vector<8x192xf32> -> vector<8x192xf32>
    %170 = vector.extract_strided_slice %167 {offsets = [0, 0], sizes = [8, 128], strides = [1, 1]} : vector<8x192xf32> to vector<8x128xf32>
    %171 = vector.extract_strided_slice %169 {offsets = [0, 0], sizes = [8, 128], strides = [1, 1]} : vector<8x192xf32> to vector<8x128xf32>
    %172 = arith.addf %170, %171 : vector<8x128xf32>
    %cst_41 = arith.constant 0.000000e+00 : f32
    %173 = vector.broadcast %cst_41 : f32 to vector<8x128xf32>
    %174 = arith.subf %173, %172 : vector<8x128xf32>
    %175 = math.exp %174 : vector<8x128xf32>
    %cst_42 = arith.constant 1.000000e+00 : f32
    %176 = vector.broadcast %cst_42 : f32 to vector<8x128xf32>
    %177 = arith.addf %176, %175 : vector<8x128xf32>
    %cst_43 = arith.constant 1.000000e+00 : f32
    %178 = vector.broadcast %cst_43 : f32 to vector<8x128xf32>
    %179 = arith.divf %178, %177 : vector<8x128xf32>
    %180 = vector.extract_strided_slice %179 {offsets = [0, 0], sizes = [8, 64], strides = [1, 1]} : vector<8x128xf32> to vector<8x64xf32>
    %181 = vector.extract_strided_slice %179 {offsets = [0, 64], sizes = [8, 64], strides = [1, 1]} : vector<8x128xf32> to vector<8x64xf32>
    %182 = vector.extract_strided_slice %167 {offsets = [0, 128], sizes = [8, 64], strides = [1, 1]} : vector<8x192xf32> to vector<8x64xf32>
    %183 = vector.extract_strided_slice %169 {offsets = [0, 128], sizes = [8, 64], strides = [1, 1]} : vector<8x192xf32> to vector<8x64xf32>
    %184 = arith.addf %183, %9 : vector<8x64xf32>
    %185 = arith.mulf %180, %184 : vector<8x64xf32>
    %186 = arith.addf %182, %185 : vector<8x64xf32>
    %187 = math.tanh %186 : vector<8x64xf32>
    %cst_44 = arith.constant 1.000000e+00 : f32
    %188 = vector.broadcast %cst_44 : f32 to vector<8x64xf32>
    %189 = arith.subf %188, %181 : vector<8x64xf32>
    %190 = arith.mulf %189, %187 : vector<8x64xf32>
    %191 = arith.mulf %181, %166 : vector<8x64xf32>
    %192 = arith.addf %190, %191 : vector<8x64xf32>
    %193 = vector.extract_strided_slice %5 {offsets = [56, 0], sizes = [8, 192], strides = [1, 1]} : vector<64x192xf32> to vector<8x192xf32>
    %194 = arith.truncf %192 : vector<8x64xf32> to vector<8x64xbf16>
    %cst_45 = arith.constant dense<0.000000e+00> : vector<8x192xf32>
    %195 = tpu.matmul %194, %6, %cst_45 {dimension_numbers = #tpu.dot_dimension_numbers<[1], [0], [0], [1], [0, 0, 1, 1], [], []>} : vector<8x64xbf16>, vector<64x192xbf16>, vector<8x192xf32> -> vector<8x192xf32>
    %196 = vector.extract_strided_slice %193 {offsets = [0, 0], sizes = [8, 128], strides = [1, 1]} : vector<8x192xf32> to vector<8x128xf32>
    %197 = vector.extract_strided_slice %195 {offsets = [0, 0], sizes = [8, 128], strides = [1, 1]} : vector<8x192xf32> to vector<8x128xf32>
    %198 = arith.addf %196, %197 : vector<8x128xf32>
    %cst_46 = arith.constant 0.000000e+00 : f32
    %199 = vector.broadcast %cst_46 : f32 to vector<8x128xf32>
    %200 = arith.subf %199, %198 : vector<8x128xf32>
    %201 = math.exp %200 : vector<8x128xf32>
    %cst_47 = arith.constant 1.000000e+00 : f32
    %202 = vector.broadcast %cst_47 : f32 to vector<8x128xf32>
    %203 = arith.addf %202, %201 : vector<8x128xf32>
    %cst_48 = arith.constant 1.000000e+00 : f32
    %204 = vector.broadcast %cst_48 : f32 to vector<8x128xf32>
    %205 = arith.divf %204, %203 : vector<8x128xf32>
    %206 = vector.extract_strided_slice %205 {offsets = [0, 0], sizes = [8, 64], strides = [1, 1]} : vector<8x128xf32> to vector<8x64xf32>
    %207 = vector.extract_strided_slice %205 {offsets = [0, 64], sizes = [8, 64], strides = [1, 1]} : vector<8x128xf32> to vector<8x64xf32>
    %208 = vector.extract_strided_slice %193 {offsets = [0, 128], sizes = [8, 64], strides = [1, 1]} : vector<8x192xf32> to vector<8x64xf32>
    %209 = vector.extract_strided_slice %195 {offsets = [0, 128], sizes = [8, 64], strides = [1, 1]} : vector<8x192xf32> to vector<8x64xf32>
    %210 = arith.addf %209, %9 : vector<8x64xf32>
    %211 = arith.mulf %206, %210 : vector<8x64xf32>
    %212 = arith.addf %208, %211 : vector<8x64xf32>
    %213 = math.tanh %212 : vector<8x64xf32>
    %cst_49 = arith.constant 1.000000e+00 : f32
    %214 = vector.broadcast %cst_49 : f32 to vector<8x64xf32>
    %215 = arith.subf %214, %207 : vector<8x64xf32>
    %216 = arith.mulf %215, %213 : vector<8x64xf32>
    %217 = arith.mulf %207, %192 : vector<8x64xf32>
    %218 = arith.addf %216, %217 : vector<8x64xf32>
    %c0_50 = arith.constant 0 : index
    %c0_51 = arith.constant 0 : index
    %219 = vector.load %arg5[%c0_50, %c0_51] : memref<64x16xf32, #tpu.memory_space<vmem>>, vector<64x16xf32>
    %cst_52 = arith.constant dense<0.000000e+00> : vector<8x16xf32>
    %220 = tpu.matmul %218, %219, %cst_52 {dimension_numbers = #tpu.dot_dimension_numbers<[1], [0], [0], [1], [0, 0, 1, 1], [], []>} : vector<8x64xf32>, vector<64x16xf32>, vector<8x16xf32> -> vector<8x16xf32>
    %c0_53 = arith.constant 0 : index
    %c0_54 = arith.constant 0 : index
    %221 = vector.load %arg6[%c0_53, %c0_54] : memref<1x16xf32, #tpu.memory_space<vmem>>, vector<1x16xf32>
    %222 = vector.broadcast %221 : vector<1x16xf32> to vector<8x16xf32>
    %223 = arith.addf %220, %222 : vector<8x16xf32>
    %c0_55 = arith.constant 0 : index
    %c0_56 = arith.constant 0 : index
    %224 = vector.load %arg7[%c0_55, %c0_56] : memref<8x16xf32, #tpu.memory_space<vmem>>, vector<8x16xf32>
    tpu.vector_store %arg7[%c0_55, %c0_56], %223 {strides = array<i32>} : memref<8x16xf32, #tpu.memory_space<vmem>>, vector<8x16xf32>,
    return
  }
}

</mosaic_0001>

<llo_original>
// kernel: tpu_custom_call.1
$region0: #{tpu_custom_call.1}
  #allocation0 [shape = 'u32[]', space=smem, size = 0x4, offset = 0x4, fixed_abs, tag = 'smem constant byte address 0x4 - core index']
  #allocation1 [shape = 'u32[144,128]{1,0:T(1,128)}', space=vmem, size = 0x12000, scoped, tag = 'internal scratch']
  %s0 = inlined_call_operand.vmem [shape: f32[64,8], index: 0, kind: input, shape index: {}]
  %s1 = inlined_call_operand.vmem [shape: f32[8,192], index: 1, kind: input, shape index: {}]
  %s2 = inlined_call_operand.vmem [shape: f32[1,192], index: 2, kind: input, shape index: {}]
  %s3 = inlined_call_operand.vmem [shape: bf16[64,192], index: 3, kind: input, shape index: {}]
  %s4 = inlined_call_operand.vmem [shape: f32[1,64], index: 4, kind: input, shape index: {}]
  %s5 = inlined_call_operand.vmem [shape: f32[64,16], index: 5, kind: input, shape index: {}]
  %s6 = inlined_call_operand.vmem [shape: f32[1,16], index: 6, kind: input, shape index: {}]
  %s7 = inlined_call_operand.hbm [shape: f32[8,16], index: 7, kind: output, shape index: {}]
  %s8 = sld [smem:[#allocation0]]
  $region38: #{tpu_custom_call.1} parent=0
    _
  %s10 = ssub.s32 1, %s8
  %s11 = scalar_select 0, %s10, %s8
  $region1: #{tpu_custom_call.1} parent=0
    #allocation2 [shape = 'u8[4096]{0}', space=vmem, size = 0x1000, scoped, tag = 'output window, operand 0, single buffered']
    #allocation3 [shape = 's32[1]{0}', space=sflag, size = 0x4, scoped, tag = 'scoped memory for tpu_custom_call.1']
    %12 = vsyncpa [#allocation3], 0
    // Predicated region
    $region2: #{tpu_custom_call.1} parent=1 // pred_check
      _
    $region3: #{tpu_custom_call.1} parent=1 // pred_check_branch
      %14 = sbr.rel (0) target = $region5
    $region4: #{tpu_custom_call.1} parent=1 // pred_region
      _
    $region5: #{tpu_custom_call.1} parent=1 // pred_fallthru
      _
    // Predicated region
    $region6: #{tpu_custom_call.1} parent=1 // pred_check
      _
    $region7: #{tpu_custom_call.1} parent=1 // pred_check_branch
      %16 = sbr.rel (0) target = $region9
    $region8: #{tpu_custom_call.1} parent=1 // pred_region
      _
    $region9: #{tpu_custom_call.1} parent=1 // pred_fallthru
      _
    // Predicated region
    $region10: #{tpu_custom_call.1} parent=1 // pred_check
      _
    $region11: #{tpu_custom_call.1} parent=1 // pred_check_branch
      %18 = sbr.rel (0) target = $region13
    $region12: #{tpu_custom_call.1} parent=1 // pred_region
      _
    $region13: #{tpu_custom_call.1} parent=1 // pred_fallthru
      _
    // Predicated region
    $region14: #{tpu_custom_call.1} parent=1 // pred_check
      _
    $region15: #{tpu_custom_call.1} parent=1 // pred_check_branch
      %20 = sbr.rel (0) target = $region17
    $region16: #{tpu_custom_call.1} parent=1 // pred_region
      _
    $region17: #{tpu_custom_call.1} parent=1 // pred_fallthru
      _
    // Predicated region
    $region18: #{tpu_custom_call.1} parent=1 // pred_check
      _
    $region19: #{tpu_custom_call.1} parent=1 // pred_check_branch
      %22 = sbr.rel (0) target = $region21
    $region20: #{tpu_custom_call.1} parent=1 // pred_region
      _
    $region21: #{tpu_custom_call.1} parent=1 // pred_fallthru
      _
    // Predicated region
    $region22: #{tpu_custom_call.1} parent=1 // pred_check
      _
    $region23: #{tpu_custom_call.1} parent=1 // pred_check_branch
      %24 = sbr.rel (0) target = $region25
    $region24: #{tpu_custom_call.1} parent=1 // pred_region
      _
    $region25: #{tpu_custom_call.1} parent=1 // pred_fallthru
      _
    // Predicated region
    $region26: #{tpu_custom_call.1} parent=1 // pred_check
      _
    $region27: #{tpu_custom_call.1} parent=1 // pred_check_branch
      %26 = sbr.rel (0) target = $region29
    $region28: #{tpu_custom_call.1} parent=1 // pred_region
      _
    $region29: #{tpu_custom_call.1} parent=1 // pred_fallthru
      _
    %v28 = vld [vmem:[%s0] sm:$0xff]
    %v29 = vld [vmem:[%s0 + $0x8] sm:$0xff]
    %v30 = vld [vmem:[%s0 + $0x10] sm:$0xff]
    %v31 = vld [vmem:[%s0 + $0x18] sm:$0xff]
    %v32 = vld [vmem:[%s0 + $0x20] sm:$0xff]
    %v33 = vld [vmem:[%s0 + $0x28] sm:$0xff]
    %v34 = vld [vmem:[%s0 + $0x30] sm:$0xff]
    %v35 = vld [vmem:[%s0 + $0x38] sm:$0xff]
    %v36 = vld [vmem:[%s1] sm:$0xff]
    %v37 = vld [vmem:[%s1 + $0x8] sm:$0xff]
    %v38 = vld [vmem:[%s2] sm:$0x3]
    %v40 = vlaneseq
    %v41 = vshrl.u32 %v40, 7
    %v42 = vsub.s32 0, %v41
    %v43 = vrot.slane %v38, %v42
    %v44 = vlaneseq
    %v45 = vshrl.u32 %v44, 7
    %v46 = vsub.s32 1, %v45
    %v47 = vrot.slane %v38, %v46
    %vm50 = vcmask 64512
    %v52 = vsel %vm50, %v28, 0
    %v55 = vsel %vm50, %v29, 0
    %v58 = vsel %vm50, %v30, 0
    %v61 = vsel %vm50, %v31, 0
    %v64 = vsel %vm50, %v32, 0
    %v67 = vsel %vm50, %v33, 0
    %v70 = vsel %vm50, %v34, 0
    %v73 = vsel %vm50, %v35, 0
    %75 = vmatprep.subr.mxu0 %v37
    %76 = vmatpush1.msra.mxu0 %v36
    %77 = vmatprep.subr.mxu0 0.0
    %78 = vmatpush1.msra.mxu0 0.0
    %79 = vmatprep.subr.mxu0 0.0
    %80 = vmatpush1.msra.mxu0 0.0
    %81 = vmatprep.subr.mxu0 0.0
    %82 = vmatpush1.msra.mxu0 0.0
    %83 = vmatprep.subr.mxu0 0.0
    %84 = vmatpush1.msra.mxu0 0.0
    %85 = vmatprep.subr.mxu0 0.0
    %86 = vmatpush1.msra.mxu0 0.0
    %87 = vmatprep.subr.mxu0 0.0
    %88 = vmatpush1.msra.mxu0 0.0
    %89 = vmatprep.subr.mxu0 0.0
    %90 = vmatpush1.msra.mxu0 0.0
    %91 = vmatprep.subr.mxu0 0.0
    %92 = vmatpush1.msra.mxu0 0.0
    %93 = vmatprep.subr.mxu0 0.0
    %94 = vmatpush1.msra.mxu0 0.0
    %95 = vmatprep.subr.mxu0 0.0
    %96 = vmatpush1.msra.mxu0 0.0
    %97 = vmatprep.subr.mxu0 0.0
    %98 = vmatpush1.msra.mxu0 0.0
    %99 = vmatprep.subr.mxu0 0.0
    %100 = vmatpush1.msra.mxu0 0.0
    %101 = vmatprep.subr.mxu0 0.0
    %102 = vmatpush1.msra.mxu0 0.0
    %103 = vmatprep.subr.mxu0 0.0
    %104 = vmatpush1.msra.mxu0 0.0
    %105 = vmatprep.subr.mxu0 0.0
    %106 = vmatpush1.msra.mxu0 0.0
    %107 = vmatprep.subr.mxu0 0.0
    %108 = vmatpush1.msra.mxu0 0.0
    %109 = vmatprep.subr.mxu0 0.0
    %110 = vmatpush1.msra.mxu0 0.0
    %111 = vmatprep.subr.mxu0 0.0
    %112 = vmatpush1.msra.mxu0 0.0
    %113 = vmatprep.subr.mxu0 0.0
    %114 = vmatpush1.msra.mxu0 0.0
    %115 = vmatprep.subr.mxu0 0.0
    %116 = vmatpush1.msra.mxu0 0.0
    %117 = vmatprep.subr.mxu0 0.0
    %118 = vmatpush1.msra.mxu0 0.0
    %119 = vmatprep.subr.mxu0 0.0
    %120 = vmatpush1.msra.mxu0 0.0
    %121 = vmatprep.subr.mxu0 0.0
    %122 = vmatpush1.msra.mxu0 0.0
    %123 = vmatprep.subr.mxu0 0.0
    %124 = vmatpush1.msra.mxu0 0.0
    %125 = vmatprep.subr.mxu0 0.0
    %126 = vmatpush1.msra.mxu0 0.0
    %127 = vmatprep.subr.mxu0 0.0
    %128 = vmatpush1.msra.mxu0 0.0
    %129 = vmatprep.subr.mxu0 0.0
    %130 = vmatpush1.msra.mxu0 0.0
    %131 = vmatprep.subr.mxu0 0.0
    %132 = vmatpush1.msra.mxu0 0.0
    %133 = vmatprep.subr.mxu0 0.0
    %134 = vmatpush1.msra.mxu0 0.0
    %135 = vmatprep.subr.mxu0 0.0
    %136 = vmatpush1.msra.mxu0 0.0
    %137 = vmatprep.subr.mxu0 0.0
    %138 = vmatpush1.msra.mxu0 0.0
    %139 = vmatprep.mubr.f32.mxu0 0.0
    %140 = vmatmul.mubr.f32.gmra.mrb[0].mxu0 %v52
    %v141 = vpop.f32.mrb[0].mxu0
    %v142 = vadd.f32 %v43, %v141
    %v143 = vpop.f32.mrb[0].mxu0
    %v144 = vadd.f32 %v47, %v143
    %145 = vmatprep.mubr.f32.mxu0 0.0
    %146 = vmatmul.mubr.f32.gmra.mrb[0].mxu0 %v55
    %v147 = vpop.f32.mrb[0].mxu0
    %v148 = vadd.f32 %v43, %v147
    %v149 = vpop.f32.mrb[0].mxu0
    %v150 = vadd.f32 %v47, %v149
    %151 = vmatprep.mubr.f32.mxu0 0.0
    %152 = vmatmul.mubr.f32.gmra.mrb[0].mxu0 %v58
    %v153 = vpop.f32.mrb[0].mxu0
    %v154 = vadd.f32 %v43, %v153
    %v155 = vpop.f32.mrb[0].mxu0
    %v156 = vadd.f32 %v47, %v155
    %157 = vmatprep.mubr.f32.mxu0 0.0
    %158 = vmatmul.mubr.f32.gmra.mrb[0].mxu0 %v61
    %v159 = vpop.f32.mrb[0].mxu0
    %v160 = vadd.f32 %v43, %v159
    %v161 = vpop.f32.mrb[0].mxu0
    %v162 = vadd.f32 %v47, %v161
    %163 = vmatprep.mubr.f32.mxu0 0.0
    %164 = vmatmul.mubr.f32.gmra.mrb[0].mxu0 %v64
    %v165 = vpop.f32.mrb[0].mxu0
    %v166 = vadd.f32 %v43, %v165
    %v167 = vpop.f32.mrb[0].mxu0
    %v168 = vadd.f32 %v47, %v167
    %169 = vmatprep.mubr.f32.mxu0 0.0
    %170 = vmatmul.mubr.f32.gmra.mrb[0].mxu0 %v67
    %v171 = vpop.f32.mrb[0].mxu0
    %v172 = vadd.f32 %v43, %v171
    %v173 = vpop.f32.mrb[0].mxu0
    %v174 = vadd.f32 %v47, %v173
    %175 = vmatprep.mubr.f32.mxu0 0.0
    %176 = vmatmul.mubr.f32.gmra.mrb[0].mxu0 %v70
    %v177 = vpop.f32.mrb[0].mxu0
    %v178 = vadd.f32 %v43, %v177
    %v179 = vpop.f32.mrb[0].mxu0
    %v180 = vadd.f32 %v47, %v179
    %181 = vmatprep.mubr.f32.mxu0 0.0
    %182 = vmatmul.mubr.f32.gmra.mrb[0].mxu0 %v73
    %v183 = vpop.f32.mrb[0].mxu0
    %v184 = vadd.f32 %v43, %v183
    %v185 = vpop.f32.mrb[0].mxu0
    %v186 = vadd.f32 %v47, %v185
    %187 = vdwg.mxu0
    %v188 = vld [vmem:[%s3] sm:$0xff]
    %v189 = vld [vmem:[%s3 + $0x8] sm:$0xff]
    %v190 = vld [vmem:[%s3 + $0x10] sm:$0xff]
    %v191 = vld [vmem:[%s3 + $0x18] sm:$0xff]
    %v192 = vld [vmem:[%s3 + $0x20] sm:$0xff]
    %v193 = vld [vmem:[%s3 + $0x28] sm:$0xff]
    %v194 = vld [vmem:[%s3 + $0x30] sm:$0xff]
    %v195 = vld [vmem:[%s3 + $0x38] sm:$0xff]
    %v196 = vld [vmem:[%s4] sm:$0x1]
    %v198 = vlaneseq
    %v199 = vshrl.u32 %v198, 7
    %v200 = vsub.s32 0, %v199
    %v201 = vrot.slane %v196, %v200
    %v211 = vunpack.c.l.b16 %v188
    %v212 = vunpack.c.h.b16 %v188
    %v213 = vunpack.c.l.b16 %v189
    %v214 = vunpack.c.h.b16 %v189
    %v215 = vunpack.c.l.b16 %v190
    %v216 = vunpack.c.h.b16 %v190
    %v217 = vunpack.c.l.b16 %v191
    %v218 = vunpack.c.h.b16 %v191
    %v219 = vunpack.c.l.b16 %v192
    %v220 = vunpack.c.h.b16 %v192
    %v221 = vunpack.c.l.b16 %v193
    %v222 = vunpack.c.h.b16 %v193
    %v223 = vunpack.c.l.b16 %v194
    %v224 = vunpack.c.h.b16 %v194
    %v225 = vunpack.c.l.b16 %v195
    %v226 = vunpack.c.h.b16 %v195
    %v227 = vpack.c.b16 %v213, %v211
    %v228 = vpack.c.b16 %v214, %v212
    %v229 = vpack.c.b16 %v217, %v215
    %v230 = vpack.c.b16 %v218, %v216
    %v231 = vpack.c.b16 %v221, %v219
    %v232 = vpack.c.b16 %v222, %v220
    %v233 = vpack.c.b16 %v225, %v223
    %v234 = vpack.c.b16 %v226, %v224
    %vm243 = vcmask 523264
    %v245 = vsel %vm243, 0, 0
    %247 = vmatprep.subr.bf16.mxu0 %v228
    %248 = vmatpush1.bf16.msra.mxu0 %v227
    %249 = vmatprep.subr.bf16.mxu0 %v230
    %250 = vmatpush1.bf16.msra.mxu0 %v229
    %251 = vmatprep.subr.bf16.mxu0 %v232
    %252 = vmatpush1.bf16.msra.mxu0 %v231
    %253 = vmatprep.subr.bf16.mxu0 %v234
    %254 = vmatpush1.bf16.msra.mxu0 %v233
    %255 = vmatprep.subr.bf16.mxu0 0
    %256 = vmatpush1.bf16.msra.mxu0 0
    %257 = vmatprep.subr.bf16.mxu0 0
    %258 = vmatpush1.bf16.msra.mxu0 0
    %259 = vmatprep.subr.bf16.mxu0 0
    %260 = vmatpush1.bf16.msra.mxu0 0
    %261 = vmatprep.subr.bf16.mxu0 0
    %262 = vmatpush1.bf16.msra.mxu0 0
    %263 = vmatprep.subr.bf16.mxu0 0
    %264 = vmatpush1.bf16.msra.mxu0 0
    %265 = vmatprep.subr.bf16.mxu0 0
    %266 = vmatpush1.bf16.msra.mxu0 0
    %267 = vmatprep.subr.bf16.mxu0 0
    %268 = vmatpush1.bf16.msra.mxu0 0
    %269 = vmatprep.subr.bf16.mxu0 0
    %270 = vmatpush1.bf16.msra.mxu0 0
    %271 = vmatprep.subr.bf16.mxu0 0
    %272 = vmatpush1.bf16.msra.mxu0 0
    %273 = vmatprep.subr.bf16.mxu0 0
    %274 = vmatpush1.bf16.msra.mxu0 0
    %275 = vmatprep.subr.bf16.mxu0 0
    %276 = vmatpush1.bf16.msra.mxu0 0
    %277 = vmatprep.subr.bf16.mxu0 0
    %278 = vmatpush1.bf16.msra.mxu0 0
    %279 = vmatprep.mubr.bf16.mxu0 0
    %280 = vmatmul.mubr.bf16.gmra.mrb[0].mxu0 %v245
    %v281 = vpop.f32.mrb[0].mxu0
    %v282 = vadd.f32 0.0, %v281
    %v283 = vpop.f32.mrb[0].mxu0
    %v284 = vadd.f32 0.0, %v283
    %v285 = vpop.f32.mrb[0].mxu0
    %v286 = vpop.f32.mrb[0].mxu0
    %287 = vdwg.mxu0
    %v288 = vadd.f32 %v142, %v282
    %v289 = vsub.f32 0.0, %v288
    %v290 = vmul.f32 %v289, 1.442695
    %v291 = vpow.pop %v290
    %v292 = vadd.f32 %v291, 1.0
    %v293 = vrcp.pop %v292
    %v294 = vmul.f32 1.0, %v293
    %v295 = vadd.f32 %v284, %v201
    %v296 = vmul.f32 %v294, %v295
    %v297 = vadd.f32 %v144, %v296
    %v298 = vtanh.pop %v297
    %v299 = vsub.f32 1.0, %v294
    %301 = vrot.lane.b32.xlu0 %v298, 64
    %v302 = vpop.permute.xlu0 %301
    %v304 = vmul.f32 %v299, %v302
    %v305 = vmul.f32 %v294, 0.0
    %v306 = vadd.f32 %v304, %v305
    %v307 = vpack.c.bf16 %v306, %v306
    %309 = vrot.lane.b32.xlu0 %v307, 64
    %v310 = vpop.permute.xlu0 %309
    %v312 = vsel %vm243, %v310, 0
    %314 = vmatprep.subr.bf16.mxu0 %v228
    %315 = vmatpush1.bf16.msra.mxu0 %v227
    %316 = vmatprep.subr.bf16.mxu0 %v230
    %317 = vmatpush1.bf16.msra.mxu0 %v229
    %318 = vmatprep.subr.bf16.mxu0 %v232
    %319 = vmatpush1.bf16.msra.mxu0 %v231
    %320 = vmatprep.subr.bf16.mxu0 %v234
    %321 = vmatpush1.bf16.msra.mxu0 %v233
    %322 = vmatprep.subr.bf16.mxu0 0
    %323 = vmatpush1.bf16.msra.mxu0 0
    %324 = vmatprep.subr.bf16.mxu0 0
    %325 = vmatpush1.bf16.msra.mxu0 0
    %326 = vmatprep.subr.bf16.mxu0 0
    %327 = vmatpush1.bf16.msra.mxu0 0
    %328 = vmatprep.subr.bf16.mxu0 0
    %329 = vmatpush1.bf16.msra.mxu0 0
    %330 = vmatprep.subr.bf16.mxu0 0
    %331 = vmatpush1.bf16.msra.mxu0 0
    %332 = vmatprep.subr.bf16.mxu0 0
    %333 = vmatpush1.bf16.msra.mxu0 0
    %334 = vmatprep.subr.bf16.mxu0 0
    %335 = vmatpush1.bf16.msra.mxu0 0
    %336 = vmatprep.subr.bf16.mxu0 0
    %337 = vmatpush1.bf16.msra.mxu0 0
    %338 = vmatprep.subr.bf16.mxu0 0
    %339 = vmatpush1.bf16.msra.mxu0 0
    %340 = vmatprep.subr.bf16.mxu0 0
    %341 = vmatpush1.bf16.msra.mxu0 0
    %342 = vmatprep.subr.bf16.mxu0 0
    %343 = vmatpush1.bf16.msra.mxu0 0
    %344 = vmatprep.subr.bf16.mxu0 0
    %345 = vmatpush1.bf16.msra.mxu0 0
    %346 = vmatprep.mubr.bf16.mxu0 0
    %347 = vmatmul.mubr.bf16.gmra.mrb[0].mxu0 %v312
    %v348 = vpop.f32.mrb[0].mxu0
    %v349 = vadd.f32 0.0, %v348
    %v350 = vpop.f32.mrb[0].mxu0
    %v351 = vadd.f32 0.0, %v350
    %v352 = vpop.f32.mrb[0].mxu0
    %v353 = vpop.f32.mrb[0].mxu0
    %354 = vdwg.mxu0
    %v355 = vadd.f32 %v148, %v349
    %v356 = vsub.f32 0.0, %v355
    %v357 = vmul.f32 %v356, 1.442695
    %v358 = vpow.pop %v357
    %v359 = vadd.f32 %v358, 1.0
    %v360 = vrcp.pop %v359
    %v361 = vmul.f32 1.0, %v360
    %v362 = vadd.f32 %v351, %v201
    %v363 = vmul.f32 %v361, %v362
    %v364 = vadd.f32 %v150, %v363
    %v365 = vtanh.pop %v364
    %v366 = vsub.f32 1.0, %v361
    %368 = vrot.lane.b32.xlu0 %v365, 64
    %v369 = vpop.permute.xlu0 %368
    %v371 = vmul.f32 %v366, %v369
    %v372 = vmul.f32 %v361, %v306
    %v373 = vadd.f32 %v371, %v372
    %v374 = vpack.c.bf16 %v373, %v373
    %376 = vrot.lane.b32.xlu0 %v374, 64
    %v377 = vpop.permute.xlu0 %376
    %v379 = vsel %vm243, %v377, 0
    %381 = vmatprep.subr.bf16.mxu0 %v228
    %382 = vmatpush1.bf16.msra.mxu0 %v227
    %383 = vmatprep.subr.bf16.mxu0 %v230
    %384 = vmatpush1.bf16.msra.mxu0 %v229
    %385 = vmatprep.subr.bf16.mxu0 %v232
    %386 = vmatpush1.bf16.msra.mxu0 %v231
    %387 = vmatprep.subr.bf16.mxu0 %v234
    %388 = vmatpush1.bf16.msra.mxu0 %v233
    %389 = vmatprep.subr.bf16.mxu0 0
    %390 = vmatpush1.bf16.msra.mxu0 0
    %391 = vmatprep.subr.bf16.mxu0 0
    %392 = vmatpush1.bf16.msra.mxu0 0
    %393 = vmatprep.subr.bf16.mxu0 0
    %394 = vmatpush1.bf16.msra.mxu0 0
    %395 = vmatprep.subr.bf16.mxu0 0
    %396 = vmatpush1.bf16.msra.mxu0 0
    %397 = vmatprep.subr.bf16.mxu0 0
    %398 = vmatpush1.bf16.msra.mxu0 0
    %399 = vmatprep.subr.bf16.mxu0 0
    %400 = vmatpush1.bf16.msra.mxu0 0
    %401 = vmatprep.subr.bf16.mxu0 0
    %402 = vmatpush1.bf16.msra.mxu0 0
    %403 = vmatprep.subr.bf16.mxu0 0
    %404 = vmatpush1.bf16.msra.mxu0 0
    %405 = vmatprep.subr.bf16.mxu0 0
    %406 = vmatpush1.bf16.msra.mxu0 0
    %407 = vmatprep.subr.bf16.mxu0 0
    %408 = vmatpush1.bf16.msra.mxu0 0
    %409 = vmatprep.subr.bf16.mxu0 0
    %410 = vmatpush1.bf16.msra.mxu0 0
    %411 = vmatprep.subr.bf16.mxu0 0
    %412 = vmatpush1.bf16.msra.mxu0 0
    %413 = vmatprep.mubr.bf16.mxu0 0
    %414 = vmatmul.mubr.bf16.gmra.mrb[0].mxu0 %v379
    %v415 = vpop.f32.mrb[0].mxu0
    %v416 = vadd.f32 0.0, %v415
    %v417 = vpop.f32.mrb[0].mxu0
    %v418 = vadd.f32 0.0, %v417
    %v419 = vpop.f32.mrb[0].mxu0
    %v420 = vpop.f32.mrb[0].mxu0
    %421 = vdwg.mxu0
    %v422 = vadd.f32 %v154, %v416
    %v423 = vsub.f32 0.0, %v422
    %v424 = vmul.f32 %v423, 1.442695
    %v425 = vpow.pop %v424
    %v426 = vadd.f32 %v425, 1.0
    %v427 = vrcp.pop %v426
    %v428 = vmul.f32 1.0, %v427
    %v429 = vadd.f32 %v418, %v201
    %v430 = vmul.f32 %v428, %v429
    %v431 = vadd.f32 %v156, %v430
    %v432 = vtanh.pop %v431
    %v433 = vsub.f32 1.0, %v428
    %435 = vrot.lane.b32.xlu0 %v432, 64
    %v436 = vpop.permute.xlu0 %435
    %v438 = vmul.f32 %v433, %v436
    %v439 = vmul.f32 %v428, %v373
    %v440 = vadd.f32 %v438, %v439
    %v441 = vpack.c.bf16 %v440, %v440
    %443 = vrot.lane.b32.xlu0 %v441, 64
    %v444 = vpop.permute.xlu0 %443
    %v446 = vsel %vm243, %v444, 0
    %448 = vmatprep.subr.bf16.mxu0 %v228
    %449 = vmatpush1.bf16.msra.mxu0 %v227
    %450 = vmatprep.subr.bf16.mxu0 %v230
    %451 = vmatpush1.bf16.msra.mxu0 %v229
    %452 = vmatprep.subr.bf16.mxu0 %v232
    %453 = vmatpush1.bf16.msra.mxu0 %v231
    %454 = vmatprep.subr.bf16.mxu0 %v234
    %455 = vmatpush1.bf16.msra.mxu0 %v233
    %456 = vmatprep.subr.bf16.mxu0 0
    %457 = vmatpush1.bf16.msra.mxu0 0
    %458 = vmatprep.subr.bf16.mxu0 0
    %459 = vmatpush1.bf16.msra.mxu0 0
    %460 = vmatprep.subr.bf16.mxu0 0
    %461 = vmatpush1.bf16.msra.mxu0 0
    %462 = vmatprep.subr.bf16.mxu0 0
    %463 = vmatpush1.bf16.msra.mxu0 0
    %464 = vmatprep.subr.bf16.mxu0 0
    %465 = vmatpush1.bf16.msra.mxu0 0
    %466 = vmatprep.subr.bf16.mxu0 0
    %467 = vmatpush1.bf16.msra.mxu0 0
    %468 = vmatprep.subr.bf16.mxu0 0
    %469 = vmatpush1.bf16.msra.mxu0 0
    %470 = vmatprep.subr.bf16.mxu0 0
    %471 = vmatpush1.bf16.msra.mxu0 0
    %472 = vmatprep.subr.bf16.mxu0 0
    %473 = vmatpush1.bf16.msra.mxu0 0
    %474 = vmatprep.subr.bf16.mxu0 0
    %475 = vmatpush1.bf16.msra.mxu0 0
    %476 = vmatprep.subr.bf16.mxu0 0
    %477 = vmatpush1.bf16.msra.mxu0 0
    %478 = vmatprep.subr.bf16.mxu0 0
    %479 = vmatpush1.bf16.msra.mxu0 0
    %480 = vmatprep.mubr.bf16.mxu0 0
    %481 = vmatmul.mubr.bf16.gmra.mrb[0].mxu0 %v446
    %v482 = vpop.f32.mrb[0].mxu0
    %v483 = vadd.f32 0.0, %v482
    %v484 = vpop.f32.mrb[0].mxu0
    %v485 = vadd.f32 0.0, %v484
    %v486 = vpop.f32.mrb[0].mxu0
    %v487 = vpop.f32.mrb[0].mxu0
    %488 = vdwg.mxu0
    %v489 = vadd.f32 %v160, %v483
    %v490 = vsub.f32 0.0, %v489
    %v491 = vmul.f32 %v490, 1.442695
    %v492 = vpow.pop %v491
    %v493 = vadd.f32 %v492, 1.0
    %v494 = vrcp.pop %v493
    %v495 = vmul.f32 1.0, %v494
    %v496 = vadd.f32 %v485, %v201
    %v497 = vmul.f32 %v495, %v496
    %v498 = vadd.f32 %v162, %v497
    %v499 = vtanh.pop %v498
    %v500 = vsub.f32 1.0, %v495
    %502 = vrot.lane.b32.xlu0 %v499, 64
    %v503 = vpop.permute.xlu0 %502
    %v505 = vmul.f32 %v500, %v503
    %v506 = vmul.f32 %v495, %v440
    %v507 = vadd.f32 %v505, %v506
    %v508 = vpack.c.bf16 %v507, %v507
    %510 = vrot.lane.b32.xlu0 %v508, 64
    %v511 = vpop.permute.xlu0 %510
    %v513 = vsel %vm243, %v511, 0
    %515 = vmatprep.subr.bf16.mxu0 %v228
    %516 = vmatpush1.bf16.msra.mxu0 %v227
    %517 = vmatprep.subr.bf16.mxu0 %v230
    %518 = vmatpush1.bf16.msra.mxu0 %v229
    %519 = vmatprep.subr.bf16.mxu0 %v232
    %520 = vmatpush1.bf16.msra.mxu0 %v231
    %521 = vmatprep.subr.bf16.mxu0 %v234
    %522 = vmatpush1.bf16.msra.mxu0 %v233
    %523 = vmatprep.subr.bf16.mxu0 0
    %524 = vmatpush1.bf16.msra.mxu0 0
    %525 = vmatprep.subr.bf16.mxu0 0
    %526 = vmatpush1.bf16.msra.mxu0 0
    %527 = vmatprep.subr.bf16.mxu0 0
    %528 = vmatpush1.bf16.msra.mxu0 0
    %529 = vmatprep.subr.bf16.mxu0 0
    %530 = vmatpush1.bf16.msra.mxu0 0
    %531 = vmatprep.subr.bf16.mxu0 0
    %532 = vmatpush1.bf16.msra.mxu0 0
    %533 = vmatprep.subr.bf16.mxu0 0
    %534 = vmatpush1.bf16.msra.mxu0 0
    %535 = vmatprep.subr.bf16.mxu0 0
    %536 = vmatpush1.bf16.msra.mxu0 0
    %537 = vmatprep.subr.bf16.mxu0 0
    %538 = vmatpush1.bf16.msra.mxu0 0
    %539 = vmatprep.subr.bf16.mxu0 0
    %540 = vmatpush1.bf16.msra.mxu0 0
    %541 = vmatprep.subr.bf16.mxu0 0
    %542 = vmatpush1.bf16.msra.mxu0 0
    %543 = vmatprep.subr.bf16.mxu0 0
    %544 = vmatpush1.bf16.msra.mxu0 0
    %545 = vmatprep.subr.bf16.mxu0 0
    %546 = vmatpush1.bf16.msra.mxu0 0
    %547 = vmatprep.mubr.bf16.mxu0 0
    %548 = vmatmul.mubr.bf16.gmra.mrb[0].mxu0 %v513
    %v549 = vpop.f32.mrb[0].mxu0
    %v550 = vadd.f32 0.0, %v549
    %v551 = vpop.f32.mrb[0].mxu0
    %v552 = vadd.f32 0.0, %v551
    %v553 = vpop.f32.mrb[0].mxu0
    %v554 = vpop.f32.mrb[0].mxu0
    %555 = vdwg.mxu0
    %v556 = vadd.f32 %v166, %v550
    %v557 = vsub.f32 0.0, %v556
    %v558 = vmul.f32 %v557, 1.442695
    %v559 = vpow.pop %v558
    %v560 = vadd.f32 %v559, 1.0
    %v561 = vrcp.pop %v560
    %v562 = vmul.f32 1.0, %v561
    %v563 = vadd.f32 %v552, %v201
    %v564 = vmul.f32 %v562, %v563
    %v565 = vadd.f32 %v168, %v564
    %v566 = vtanh.pop %v565
    %v567 = vsub.f32 1.0, %v562
    %569 = vrot.lane.b32.xlu0 %v566, 64
    %v570 = vpop.permute.xlu0 %569
    %v572 = vmul.f32 %v567, %v570
    %v573 = vmul.f32 %v562, %v507
    %v574 = vadd.f32 %v572, %v573
    %v575 = vpack.c.bf16 %v574, %v574
    %577 = vrot.lane.b32.xlu0 %v575, 64
    %v578 = vpop.permute.xlu0 %577
    %v580 = vsel %vm243, %v578, 0
    %582 = vmatprep.subr.bf16.mxu0 %v228
    %583 = vmatpush1.bf16.msra.mxu0 %v227
    %584 = vmatprep.subr.bf16.mxu0 %v230
    %585 = vmatpush1.bf16.msra.mxu0 %v229
    %586 = vmatprep.subr.bf16.mxu0 %v232
    %587 = vmatpush1.bf16.msra.mxu0 %v231
    %588 = vmatprep.subr.bf16.mxu0 %v234
    %589 = vmatpush1.bf16.msra.mxu0 %v233
    %590 = vmatprep.subr.bf16.mxu0 0
    %591 = vmatpush1.bf16.msra.mxu0 0
    %592 = vmatprep.subr.bf16.mxu0 0
    %593 = vmatpush1.bf16.msra.mxu0 0
    %594 = vmatprep.subr.bf16.mxu0 0
    %595 = vmatpush1.bf16.msra.mxu0 0
    %596 = vmatprep.subr.bf16.mxu0 0
    %597 = vmatpush1.bf16.msra.mxu0 0
    %598 = vmatprep.subr.bf16.mxu0 0
    %599 = vmatpush1.bf16.msra.mxu0 0
    %600 = vmatprep.subr.bf16.mxu0 0
    %601 = vmatpush1.bf16.msra.mxu0 0
    %602 = vmatprep.subr.bf16.mxu0 0
    %603 = vmatpush1.bf16.msra.mxu0 0
    %604 = vmatprep.subr.bf16.mxu0 0
    %605 = vmatpush1.bf16.msra.mxu0 0
    %606 = vmatprep.subr.bf16.mxu0 0
    %607 = vmatpush1.bf16.msra.mxu0 0
    %608 = vmatprep.subr.bf16.mxu0 0
    %609 = vmatpush1.bf16.msra.mxu0 0
    %610 = vmatprep.subr.bf16.mxu0 0
    %611 = vmatpush1.bf16.msra.mxu0 0
    %612 = vmatprep.subr.bf16.mxu0 0
    %613 = vmatpush1.bf16.msra.mxu0 0
    %614 = vmatprep.mubr.bf16.mxu0 0
    %615 = vmatmul.mubr.bf16.gmra.mrb[0].mxu0 %v580
    %v616 = vpop.f32.mrb[0].mxu0
    %v617 = vadd.f32 0.0, %v616
    %v618 = vpop.f32.mrb[0].mxu0
    %v619 = vadd.f32 0.0, %v618
    %v620 = vpop.f32.mrb[0].mxu0
    %v621 = vpop.f32.mrb[0].mxu0
    %622 = vdwg.mxu0
    %v623 = vadd.f32 %v172, %v617
    %v624 = vsub.f32 0.0, %v623
    %v625 = vmul.f32 %v624, 1.442695
    %v626 = vpow.pop %v625
    %v627 = vadd.f32 %v626, 1.0
    %v628 = vrcp.pop %v627
    %v629 = vmul.f32 1.0, %v628
    %v630 = vadd.f32 %v619, %v201
    %v631 = vmul.f32 %v629, %v630
    %v632 = vadd.f32 %v174, %v631
    %v633 = vtanh.pop %v632
    %v634 = vsub.f32 1.0, %v629
    %636 = vrot.lane.b32.xlu0 %v633, 64
    %v637 = vpop.permute.xlu0 %636
    %v639 = vmul.f32 %v634, %v637
    %v640 = vmul.f32 %v629, %v574
    %v641 = vadd.f32 %v639, %v640
    %v642 = vpack.c.bf16 %v641, %v641
    %644 = vrot.lane.b32.xlu0 %v642, 64
    %v645 = vpop.permute.xlu0 %644
    %v647 = vsel %vm243, %v645, 0
    %649 = vmatprep.subr.bf16.mxu0 %v228
    %650 = vmatpush1.bf16.msra.mxu0 %v227
    %651 = vmatprep.subr.bf16.mxu0 %v230
    %652 = vmatpush1.bf16.msra.mxu0 %v229
    %653 = vmatprep.subr.bf16.mxu0 %v232
    %654 = vmatpush1.bf16.msra.mxu0 %v231
    %655 = vmatprep.subr.bf16.mxu0 %v234
    %656 = vmatpush1.bf16.msra.mxu0 %v233
    %657 = vmatprep.subr.bf16.mxu0 0
    %658 = vmatpush1.bf16.msra.mxu0 0
    %659 = vmatprep.subr.bf16.mxu0 0
    %660 = vmatpush1.bf16.msra.mxu0 0
    %661 = vmatprep.subr.bf16.mxu0 0
    %662 = vmatpush1.bf16.msra.mxu0 0
    %663 = vmatprep.subr.bf16.mxu0 0
    %664 = vmatpush1.bf16.msra.mxu0 0
    %665 = vmatprep.subr.bf16.mxu0 0
    %666 = vmatpush1.bf16.msra.mxu0 0
    %667 = vmatprep.subr.bf16.mxu0 0
    %668 = vmatpush1.bf16.msra.mxu0 0
    %669 = vmatprep.subr.bf16.mxu0 0
    %670 = vmatpush1.bf16.msra.mxu0 0
    %671 = vmatprep.subr.bf16.mxu0 0
    %672 = vmatpush1.bf16.msra.mxu0 0
    %673 = vmatprep.subr.bf16.mxu0 0
    %674 = vmatpush1.bf16.msra.mxu0 0
    %675 = vmatprep.subr.bf16.mxu0 0
    %676 = vmatpush1.bf16.msra.mxu0 0
    %677 = vmatprep.subr.bf16.mxu0 0
    %678 = vmatpush1.bf16.msra.mxu0 0
    %679 = vmatprep.subr.bf16.mxu0 0
    %680 = vmatpush1.bf16.msra.mxu0 0
    %681 = vmatprep.mubr.bf16.mxu0 0
    %682 = vmatmul.mubr.bf16.gmra.mrb[0].mxu0 %v647
    %v683 = vpop.f32.mrb[0].mxu0
    %v684 = vadd.f32 0.0, %v683
    %v685 = vpop.f32.mrb[0].mxu0
    %v686 = vadd.f32 0.0, %v685
    %v687 = vpop.f32.mrb[0].mxu0
    %v688 = vpop.f32.mrb[0].mxu0
    %689 = vdwg.mxu0
    %v690 = vadd.f32 %v178, %v684
    %v691 = vsub.f32 0.0, %v690
    %v692 = vmul.f32 %v691, 1.442695
    %v693 = vpow.pop %v692
    %v694 = vadd.f32 %v693, 1.0
    %v695 = vrcp.pop %v694
    %v696 = vmul.f32 1.0, %v695
    %v697 = vadd.f32 %v686, %v201
    %v698 = vmul.f32 %v696, %v697
    %v699 = vadd.f32 %v180, %v698
    %v700 = vtanh.pop %v699
    %v701 = vsub.f32 1.0, %v696
    %703 = vrot.lane.b32.xlu0 %v700, 64
    %v704 = vpop.permute.xlu0 %703
    %v706 = vmul.f32 %v701, %v704
    %v707 = vmul.f32 %v696, %v641
    %v708 = vadd.f32 %v706, %v707
    %v709 = vpack.c.bf16 %v708, %v708
    %711 = vrot.lane.b32.xlu0 %v709, 64
    %v712 = vpop.permute.xlu0 %711
    %v714 = vsel %vm243, %v712, 0
    %716 = vmatprep.subr.bf16.mxu0 %v228
    %717 = vmatpush1.bf16.msra.mxu0 %v227
    %718 = vmatprep.subr.bf16.mxu0 %v230
    %719 = vmatpush1.bf16.msra.mxu0 %v229
    %720 = vmatprep.subr.bf16.mxu0 %v232
    %721 = vmatpush1.bf16.msra.mxu0 %v231
    %722 = vmatprep.subr.bf16.mxu0 %v234
    %723 = vmatpush1.bf16.msra.mxu0 %v233
    %724 = vmatprep.subr.bf16.mxu0 0
    %725 = vmatpush1.bf16.msra.mxu0 0
    %726 = vmatprep.subr.bf16.mxu0 0
    %727 = vmatpush1.bf16.msra.mxu0 0
    %728 = vmatprep.subr.bf16.mxu0 0
    %729 = vmatpush1.bf16.msra.mxu0 0
    %730 = vmatprep.subr.bf16.mxu0 0
    %731 = vmatpush1.bf16.msra.mxu0 0
    %732 = vmatprep.subr.bf16.mxu0 0
    %733 = vmatpush1.bf16.msra.mxu0 0
    %734 = vmatprep.subr.bf16.mxu0 0
    %735 = vmatpush1.bf16.msra.mxu0 0
    %736 = vmatprep.subr.bf16.mxu0 0
    %737 = vmatpush1.bf16.msra.mxu0 0
    %738 = vmatprep.subr.bf16.mxu0 0
    %739 = vmatpush1.bf16.msra.mxu0 0
    %740 = vmatprep.subr.bf16.mxu0 0
    %741 = vmatpush1.bf16.msra.mxu0 0
    %742 = vmatprep.subr.bf16.mxu0 0
    %743 = vmatpush1.bf16.msra.mxu0 0
    %744 = vmatprep.subr.bf16.mxu0 0
    %745 = vmatpush1.bf16.msra.mxu0 0
    %746 = vmatprep.subr.bf16.mxu0 0
    %747 = vmatpush1.bf16.msra.mxu0 0
    %748 = vmatprep.mubr.bf16.mxu0 0
    %749 = vmatmul.mubr.bf16.gmra.mrb[0].mxu0 %v714
    %v750 = vpop.f32.mrb[0].mxu0
    %v751 = vadd.f32 0.0, %v750
    %v752 = vpop.f32.mrb[0].mxu0
    %v753 = vadd.f32 0.0, %v752
    %v754 = vpop.f32.mrb[0].mxu0
    %v755 = vpop.f32.mrb[0].mxu0
    %756 = vdwg.mxu0
    %v757 = vadd.f32 %v184, %v751
    %v758 = vsub.f32 0.0, %v757
    %v759 = vmul.f32 %v758, 1.442695
    %v760 = vpow.pop %v759
    %v761 = vadd.f32 %v760, 1.0
    %v762 = vrcp.pop %v761
    %v763 = vmul.f32 1.0, %v762
    %v764 = vadd.f32 %v753, %v201
    %v765 = vmul.f32 %v763, %v764
    %v766 = vadd.f32 %v186, %v765
    %v767 = vtanh.pop %v766
    %v768 = vsub.f32 1.0, %v763
    %770 = vrot.lane.b32.xlu0 %v767, 64
    %v771 = vpop.permute.xlu0 %770
    %v773 = vmul.f32 %v768, %v771
    %v774 = vmul.f32 %v763, %v708
    %v775 = vadd.f32 %v773, %v774
    %v776 = vld [vmem:[%s5] sm:$0xff]
    %v777 = vld [vmem:[%s5 + $0x8] sm:$0xff]
    %v778 = vld [vmem:[%s5 + $0x10] sm:$0xff]
    %v779 = vld [vmem:[%s5 + $0x18] sm:$0xff]
    %v780 = vld [vmem:[%s5 + $0x20] sm:$0xff]
    %v781 = vld [vmem:[%s5 + $0x28] sm:$0xff]
    %v782 = vld [vmem:[%s5 + $0x30] sm:$0xff]
    %v783 = vld [vmem:[%s5 + $0x38] sm:$0xff]
    %v784 = vld [vmem:[%s6] sm:$0x1]
    %v786 = vlaneseq
    %v787 = vshrl.u32 %v786, 7
    %v788 = vsub.s32 0, %v787
    %v789 = vrot.slane %v784, %v788
    %792 = vrot.lane.b32.xlu0 %v775, 64
    %v793 = vpop.permute.xlu0 %792
    %v794 = vsel %vm243, %v793, 0
    %796 = vmatprep.subr.mxu0 0.0
    %797 = vmatpush1.msra.mxu0 %v776
    %798 = vmatprep.subr.mxu0 0.0
    %799 = vmatpush1.msra.mxu0 %v777
    %800 = vmatprep.subr.mxu0 0.0
    %801 = vmatpush1.msra.mxu0 %v778
    %802 = vmatprep.subr.mxu0 0.0
    %803 = vmatpush1.msra.mxu0 %v779
    %804 = vmatprep.subr.mxu0 0.0
    %805 = vmatpush1.msra.mxu0 %v780
    %806 = vmatprep.subr.mxu0 0.0
    %807 = vmatpush1.msra.mxu0 %v781
    %808 = vmatprep.subr.mxu0 0.0
    %809 = vmatpush1.msra.mxu0 %v782
    %810 = vmatprep.subr.mxu0 0.0
    %811 = vmatpush1.msra.mxu0 %v783
    %812 = vmatprep.subr.mxu0 0.0
    %813 = vmatpush1.msra.mxu0 0.0
    %814 = vmatprep.subr.mxu0 0.0
    %815 = vmatpush1.msra.mxu0 0.0
    %816 = vmatprep.subr.mxu0 0.0
    %817 = vmatpush1.msra.mxu0 0.0
    %818 = vmatprep.subr.mxu0 0.0
    %819 = vmatpush1.msra.mxu0 0.0
    %820 = vmatprep.subr.mxu0 0.0
    %821 = vmatpush1.msra.mxu0 0.0
    %822 = vmatprep.subr.mxu0 0.0
    %823 = vmatpush1.msra.mxu0 0.0
    %824 = vmatprep.subr.mxu0 0.0
    %825 = vmatpush1.msra.mxu0 0.0
    %826 = vmatprep.subr.mxu0 0.0
    %827 = vmatpush1.msra.mxu0 0.0
    %828 = vmatprep.subr.mxu0 0.0
    %829 = vmatpush1.msra.mxu0 0.0
    %830 = vmatprep.subr.mxu0 0.0
    %831 = vmatpush1.msra.mxu0 0.0
    %832 = vmatprep.subr.mxu0 0.0
    %833 = vmatpush1.msra.mxu0 0.0
    %834 = vmatprep.subr.mxu0 0.0
    %835 = vmatpush1.msra.mxu0 0.0
    %836 = vmatprep.subr.mxu0 0.0
    %837 = vmatpush1.msra.mxu0 0.0
    %838 = vmatprep.subr.mxu0 0.0
    %839 = vmatpush1.msra.mxu0 0.0
    %840 = vmatprep.subr.mxu0 0.0
    %841 = vmatpush1.msra.mxu0 0.0
    %842 = vmatprep.subr.mxu0 0.0
    %843 = vmatpush1.msra.mxu0 0.0
    %844 = vmatprep.subr.mxu0 0.0
    %845 = vmatpush1.msra.mxu0 0.0
    %846 = vmatprep.subr.mxu0 0.0
    %847 = vmatpush1.msra.mxu0 0.0
    %848 = vmatprep.subr.mxu0 0.0
    %849 = vmatpush1.msra.mxu0 0.0
    %850 = vmatprep.subr.mxu0 0.0
    %851 = vmatpush1.msra.mxu0 0.0
    %852 = vmatprep.subr.mxu0 0.0
    %853 = vmatpush1.msra.mxu0 0.0
    %854 = vmatprep.subr.mxu0 0.0
    %855 = vmatpush1.msra.mxu0 0.0
    %856 = vmatprep.subr.mxu0 0.0
    %857 = vmatpush1.msra.mxu0 0.0
    %858 = vmatprep.subr.mxu0 0.0
    %859 = vmatpush1.msra.mxu0 0.0
    %860 = vmatprep.mubr.f32.mxu0 0.0
    %861 = vmatmul.mubr.f32.gmra.mrb[0].mxu0 %v794
    %v862 = vpop.f32.mrb[0].mxu0
    %v863 = vadd.f32 %v789, %v862
    %v864 = vpop.f32.mrb[0].mxu0
    %865 = vdwg.mxu0
    %vm866 = vcmask 130048
    %867 = vst.msk [vmem:[#allocation2] sm:$0xff] %vm866, %v863
    // Predicated region
    $region30: #{tpu_custom_call.1} parent=1 // pred_check
      _
    $region31: #{tpu_custom_call.1} parent=1 // pred_check_branch
      %869 = sbr.rel (0) target = $region33
    $region32: #{tpu_custom_call.1} parent=1 // pred_region
      %s871 = ssub.s32 128, 128
      %872 = vsyncadd [#allocation3], %s871
      %s874 = sshll.u32 [#allocation2], 4
      %s875 = int_to_ptr.vmem [resolvable:$true] %s874
      %877 = dma.vmem_to_hbm [thread:$0]  %s875, 128, %s7, [#allocation3]
    $region33: #{tpu_custom_call.1} parent=1 // pred_fallthru
      _
    // Predicated region
    $region34: #{tpu_custom_call.1} parent=1 // pred_check
      _
    $region35: #{tpu_custom_call.1} parent=1 // pred_check_branch
      %879 = sbr.rel (0) target = $region37
    $region36: #{tpu_custom_call.1} parent=1 // pred_region
      %880 = dma.done [#allocation3], 128
    $region37: #{tpu_custom_call.1} parent=1 // pred_fallthru
      _
    %881 = vsyncpa [#allocation3], 1

</llo_original>
